<compile_context>
chip_gen: v5e
topology: v5e:2x2
jax: 0.10.0
libtpu: 0.0.40
codegen_flags: <defaults>
</compile_context>

<pallas_src>
import functools
import math

import jax
import jax.numpy as jnp
import numpy as np
from jax import lax
from jax.experimental import pallas as pl
from jax.experimental.pallas import tpu as pltpu


def sublayer_attention_kernel(x_ref, bias_ref, a2_ref, b2_ref,
                              wqkv_ref, bqkv_ref, wo_ref, bo_ref,
                              out_ref, ctx_ref, *, num_heads, eps):
    x = x_ref[0]                                    # (S, D) f32: residual + LN input
    S, D = x.shape
    d_k = D // num_heads
    inv_sqrt_dk = 1.0 / math.sqrt(d_k)

    # ---- LayerNorm (torch semantics: unbiased std, eps added to std) ----
    mean = jnp.mean(x, axis=-1, keepdims=True)
    diff = x - mean
    var = jnp.sum(diff * diff, axis=-1, keepdims=True) * (1.0 / (D - 1))
    inv_std = 1.0 / (jnp.sqrt(var) + eps)
    y = a2_ref[...] * diff * inv_std + b2_ref[...]  # (S, D) f32

    # ---- fused QKV projection: bf16 operands on the MXU, f32 accumulation ----
    qkv = jnp.dot(y.astype(jnp.bfloat16), wqkv_ref[...],
                  preferred_element_type=jnp.float32) + bqkv_ref[...]
    qkv_bf = qkv.astype(jnp.bfloat16)               # bf16 view for attention matmuls

    bias_all = bias_ref[0]                          # (h, 1, S) additive key mask

    # ---- per-head attention, heads unrolled in-kernel (no grid axis) ----
    # NOTE: d_k-offset slices of qkv are not 128-lane aligned in general; if the
    # bundle dump shows vrot pressure at production shapes, pad d_k to 128 in the
    # fused weight layout for the attention stage.
    for head in range(num_heads):
        q = qkv_bf[:, head * d_k:(head + 1) * d_k]
        k = qkv_bf[:, D + head * d_k:D + (head + 1) * d_k]
        v = qkv_bf[:, 2 * D + head * d_k:2 * D + (head + 1) * d_k]
        # Contract the last dims directly — feeds the MXU with no XLU transpose of K.
        s = lax.dot_general(q, k, (((1,), (1,)), ((), ())),
                            preferred_element_type=jnp.float32) * inv_sqrt_dk
        s = s + bias_all[head]                      # (1, S) broadcast over queries
        m = jnp.max(s, axis=-1, keepdims=True)
        e = jnp.exp(s - m)
        denom = jnp.sum(e, axis=-1, keepdims=True)
        # EUP approx reciprocal + one Newton refinement (near-exact, off the VALU divide path).
        r = pl.reciprocal(denom, approx=True)
        r = r * (2.0 - denom * r)
        p = (e * r).astype(jnp.bfloat16)
        # Write each head's context straight into the VMEM scratch slice
        # (bounds live ranges; no big concat at the end).
        ctx_ref[:, head * d_k:(head + 1) * d_k] = jnp.dot(
            p, v, preferred_element_type=jnp.float32)

    # ---- single full-D output projection + residual; dropout = identity ----
    attn = jnp.dot(ctx_ref[...].astype(jnp.bfloat16), wo_ref[...],
                   preferred_element_type=jnp.float32) + bo_ref[...]
    out_ref[0] = x + attn                           # written exactly once


def _vmem_limit_bytes(S, D, num_heads):
    """Per-step VMEM footprint (bytes) with slack, clamped to sane bounds."""
    f32, bf16 = 4, 2
    io = 2 * (S * D * f32) * 2                      # x + out tiles, double-buffered
    mask = 2 * (num_heads * S * f32)                # bias tile, double-buffered
    weights = (D * 3 * D + D * D) * bf16            # Buffered(1): single copy
    biases = (3 * D + 2 * D + D) * f32
    scratch = S * D * f32                           # ctx scratch
    temps = S * 3 * D * (f32 + bf16) + 2 * S * S * f32 + 2 * S * D * f32
    need = io + mask + weights + biases + scratch + temps
    return int(min(max(2 * need, 8 << 20), 64 << 20))


def sublayer_connection_attention(x, mask, ln_params, attn_params, num_heads):
    """out = x + Dropout(MHA(LN(x), LN(x), LN(x), mask)), dropout = identity."""
    B, S, D = x.shape
    assert D % num_heads == 0
    # torch's masked_fill right-aligned broadcast of mask.sum(-1) (B,1,S) against
    # (B,h,S,S) requires B == h or B == 1 (module quirk, reproduced faithfully).
    assert B == num_heads or B == 1, "module's mask broadcast requires B==h or B==1"

    a2, b2 = ln_params
    Wq, bq, Wk, bk, Wv, bv, Wo, bo = attn_params

    # Plain-JAX glue: fuse QKV weights / biases; weights go in as bf16 (MXU-native),
    # biases stay f32 and are added after the f32-accumulated matmul.
    wqkv = jnp.concatenate([Wq, Wk, Wv], axis=1).astype(jnp.bfloat16)   # (D, 3D)
    bqkv = jnp.concatenate([bq, bk, bv]).reshape(1, 3 * D)              # (1, 3D) f32
    wo = Wo.astype(jnp.bfloat16)                                        # (D, D)

    # Additive key-bias built DIRECTLY at (B, h, 1, S) — no (B,h,S,S) intermediate.
    # torch's right-aligned broadcast quirk maps the mask's batch axis onto the
    # HEAD axis (requires B==h or B==1), and the bias is identical along queries.
    mask_sum = jnp.sum(mask, axis=-1)                                   # (B, 1, S)
    neg = jnp.where(mask_sum == 0, jnp.float32(-1e9), jnp.float32(0.0)) # (B, 1, S)
    mask_bias = jnp.broadcast_to(neg.reshape(1, B, 1, S), (B, num_heads, 1, S))

    kernel = functools.partial(sublayer_attention_kernel,
                               num_heads=num_heads, eps=1e-6)

    const = dict(pipeline_mode=pl.Buffered(1))      # single-buffer constant-index inputs

    cost = pl.CostEstimate(
        flops=2 * B * (S * D * 3 * D + 2 * S * S * D + S * D * D),
        transcendentals=B * num_heads * S * S,
        bytes_accessed=(2 * B * S * D * 4 + B * num_heads * S * 4
                        + (D * 3 * D + D * D) * 2 + 6 * D * 4),
    )

    return pl.pallas_call(
        kernel,
        out_shape=jax.ShapeDtypeStruct((B, S, D), jnp.float32),
        grid_spec=pltpu.PrefetchScalarGridSpec(
            num_scalar_prefetch=0,
            grid=(B,),
            in_specs=[
                pl.BlockSpec((1, S, D), lambda b: (b, 0, 0)),                # x
                pl.BlockSpec((1, num_heads, 1, S), lambda b: (b, 0, 0, 0)),  # mask bias
                pl.BlockSpec((1, D), lambda b: (0, 0), **const),             # a_2
                pl.BlockSpec((1, D), lambda b: (0, 0), **const),             # b_2
                pl.BlockSpec((D, 3 * D), lambda b: (0, 0), **const),         # Wqkv (bf16)
                pl.BlockSpec((1, 3 * D), lambda b: (0, 0), **const),         # bqkv
                pl.BlockSpec((D, D), lambda b: (0, 0), **const),             # Wo (bf16)
                pl.BlockSpec((1, D), lambda b: (0, 0), **const),             # bo
            ],
            out_specs=pl.BlockSpec((1, S, D), lambda b: (b, 0, 0)),
            scratch_shapes=[pltpu.VMEM((S, D), jnp.float32)],                # ctx scratch
        ),
        compiler_params=pltpu.CompilerParams(
            dimension_semantics=("parallel",),
            vmem_limit_bytes=_vmem_limit_bytes(S, D, num_heads)),
        cost_estimate=cost,
    )(x, mask_bias, a2.reshape(1, D), b2.reshape(1, D),
      wqkv, bqkv, wo, bo.reshape(1, D))


def reference_jax(x, mask, ln_params, attn_params, num_heads, eps=1e-6):
    """Pure-JAX (f32) transcription of the PyTorch forward (eval mode)."""
    B, S, D = x.shape
    d_k = D // num_heads
    a2, b2 = ln_params
    Wq, bq, Wk, bk, Wv, bv, Wo, bo = attn_params

    # LayerNorm: torch.std default is unbiased (ddof=1); eps added to std.
    mean = x.mean(-1, keepdims=True)
    std = jnp.std(x, axis=-1, ddof=1, keepdims=True)
    y = a2 * (x - mean) / (std + eps) + b2

    def proj(t, W, b):
        z = t @ W + b
        return z.reshape(B, S, num_heads, d_k).transpose(0, 2, 1, 3)

    q, k, v = proj(y, Wq, bq), proj(y, Wk, bk), proj(y, Wv, bv)
    mask_sum = jnp.sum(mask, axis=-1)                           # (B, 1, S)
    scores = jnp.einsum("bhqd,bhkd->bhqk", q, k) / math.sqrt(d_k)
    scores = jnp.where(mask_sum == 0, -1e9, scores)             # torch broadcast quirk
    p = jax.nn.softmax(scores, axis=-1)
    ctx = jnp.einsum("bhqk,bhkd->bhqd", p, v).transpose(0, 2, 1, 3).reshape(B, S, D)
    return x + (ctx @ Wo + bo)                                  # dropout = identity


def init_params(key, d_model):
    ks = jax.random.split(key, 10)
    scale = 1.0 / math.sqrt(d_model)
    u = lambda k, shape: jax.random.uniform(k, shape, jnp.float32, -scale, scale)
    Wq, bq = u(ks[0], (d_model, d_model)), u(ks[1], (d_model,))
    Wk, bk = u(ks[2], (d_model, d_model)), u(ks[3], (d_model,))
    Wv, bv = u(ks[4], (d_model, d_model)), u(ks[5], (d_model,))
    Wo, bo = u(ks[6], (d_model, d_model)), u(ks[7], (d_model,))
    a2 = 1.0 + 0.1 * jax.random.normal(ks[8], (d_model,), jnp.float32)
    b2 = 0.1 * jax.random.normal(ks[9], (d_model,), jnp.float32)
    return (a2, b2), (Wq, bq, Wk, bk, Wv, bv, Wo, bo)


if __name__ == "__main__":
    B, S, d_model, h = 2, 8, 32, 2   # B == h (or B == 1) required by the module quirk
    root = jax.random.PRNGKey(0)
    k_params, k_x = jax.random.split(root, 2)

    ln_params, attn_params = init_params(k_params, d_model)
    x = jax.random.normal(k_x, (B, S, d_model), jnp.float32)

    # 0/1 mask; one full row of zeros exercises the mask.sum(-1) == 0 path.
    mask = jnp.ones((B, 1, S, S), jnp.float32)
    mask = mask.at[0, 0, S - 1, :].set(0.0)

    out = sublayer_connection_attention(x, mask, ln_params, attn_params, h)
    out = jax.block_until_ready(out)

    ref = reference_jax(x, mask, ln_params, attn_params, h)
    # Tolerance accounts for bf16 MXU operands (f32 accumulation) vs the f32 reference.
    np.testing.assert_allclose(np.asarray(out), np.asarray(ref), rtol=5e-2, atol=5e-2)

    print("KERNEL_OK")
</pallas_src>

<mosaic_0001>
module attributes {stable_mosaic.version = 11 : i64} {
  func.func @sublayer_attention_kernel(%arg0: i32, %arg1: memref<1x8x32xf32, #tpu.memory_space<vmem>>, %arg2: memref<1x2x1x8xf32, #tpu.memory_space<vmem>>, %arg3: memref<1x32xf32, #tpu.memory_space<vmem>>, %arg4: memref<1x32xf32, #tpu.memory_space<vmem>>, %arg5: memref<32x96xbf16, #tpu.memory_space<vmem>>, %arg6: memref<1x96xf32, #tpu.memory_space<vmem>>, %arg7: memref<32x32xbf16, #tpu.memory_space<vmem>>, %arg8: memref<1x32xf32, #tpu.memory_space<vmem>>, %arg9: memref<1x8x32xf32, #tpu.memory_space<vmem>>, %arg10: memref<8x32xf32, #tpu.memory_space<vmem>>) attributes {dimension_semantics = [#tpu.dimension_semantics<parallel>], iteration_bounds = array<i64: 2>, scalar_prefetch = 0 : i64, scratch_operands = 1 : i64, tpu.core_type = #tpu.core_type<tc>, window_params = [{transform_indices = @transform_0, window_bounds = array<i64: 1, 8, 32>}, {transform_indices = @transform_1, window_bounds = array<i64: 1, 2, 1, 8>}, {pipeline_mode = #tpu.pipeline_mode<synchronous>, transform_indices = @transform_2, window_bounds = array<i64: 1, 32>}, {pipeline_mode = #tpu.pipeline_mode<synchronous>, transform_indices = @transform_3, window_bounds = array<i64: 1, 32>}, {pipeline_mode = #tpu.pipeline_mode<synchronous>, transform_indices = @transform_4, window_bounds = array<i64: 32, 96>}, {pipeline_mode = #tpu.pipeline_mode<synchronous>, transform_indices = @transform_5, window_bounds = array<i64: 1, 96>}, {pipeline_mode = #tpu.pipeline_mode<synchronous>, transform_indices = @transform_6, window_bounds = array<i64: 32, 32>}, {pipeline_mode = #tpu.pipeline_mode<synchronous>, transform_indices = @transform_7, window_bounds = array<i64: 1, 32>}, {transform_indices = @transform_8, window_bounds = array<i64: 1, 8, 32>}]} {
    %c0 = arith.constant 0 : index
    %c0_0 = arith.constant 0 : index
    %c0_1 = arith.constant 0 : index
    %0 = vector.load %arg1[%c0, %c0_0, %c0_1] : memref<1x8x32xf32, #tpu.memory_space<vmem>>, vector<1x8x32xf32>
    %1 = vector.shape_cast %0 : vector<1x8x32xf32> to vector<8x32xf32>
    %cst = arith.constant dense<0.000000e+00> : vector<8xf32>
    %2 = vector.multi_reduction <add>, %1, %cst [1] : vector<8x32xf32> to vector<8xf32>
    %3 = vector.shape_cast %2 : vector<8xf32> to vector<8x1xf32>
    %cst_2 = arith.constant 3.200000e+01 : f32
    %4 = vector.broadcast %cst_2 : f32 to vector<8x1xf32>
    %5 = arith.divf %3, %4 : vector<8x1xf32>
    %6 = vector.broadcast %5 : vector<8x1xf32> to vector<8x32xf32>
    %7 = arith.subf %1, %6 : vector<8x32xf32>
    %8 = arith.mulf %7, %7 : vector<8x32xf32>
    %cst_3 = arith.constant dense<0.000000e+00> : vector<8xf32>
    %9 = vector.multi_reduction <add>, %8, %cst_3 [1] : vector<8x32xf32> to vector<8xf32>
    %10 = vector.shape_cast %9 : vector<8xf32> to vector<8x1xf32>
    %cst_4 = arith.constant 0.0322580636 : f32
    %11 = vector.broadcast %cst_4 : f32 to vector<8x1xf32>
    %12 = arith.mulf %10, %11 : vector<8x1xf32>
    %13 = math.sqrt %12 : vector<8x1xf32>
    %cst_5 = arith.constant 9.99999997E-7 : f32
    %14 = vector.broadcast %cst_5 : f32 to vector<8x1xf32>
    %15 = arith.addf %13, %14 : vector<8x1xf32>
    %cst_6 = arith.constant 1.000000e+00 : f32
    %16 = vector.broadcast %cst_6 : f32 to vector<8x1xf32>
    %17 = arith.divf %16, %15 : vector<8x1xf32>
    %c0_7 = arith.constant 0 : index
    %c0_8 = arith.constant 0 : index
    %18 = vector.load %arg3[%c0_7, %c0_8] : memref<1x32xf32, #tpu.memory_space<vmem>>, vector<1x32xf32>
    %19 = vector.broadcast %18 : vector<1x32xf32> to vector<8x32xf32>
    %20 = arith.mulf %19, %7 : vector<8x32xf32>
    %21 = vector.broadcast %17 : vector<8x1xf32> to vector<8x32xf32>
    %22 = arith.mulf %20, %21 : vector<8x32xf32>
    %c0_9 = arith.constant 0 : index
    %c0_10 = arith.constant 0 : index
    %23 = vector.load %arg4[%c0_9, %c0_10] : memref<1x32xf32, #tpu.memory_space<vmem>>, vector<1x32xf32>
    %24 = vector.broadcast %23 : vector<1x32xf32> to vector<8x32xf32>
    %25 = arith.addf %22, %24 : vector<8x32xf32>
    %26 = arith.truncf %25 : vector<8x32xf32> to vector<8x32xbf16>
    %c0_11 = arith.constant 0 : index
    %c0_12 = arith.constant 0 : index
    %27 = vector.load %arg5[%c0_11, %c0_12] : memref<32x96xbf16, #tpu.memory_space<vmem>>, vector<32x96xbf16>
    %cst_13 = arith.constant dense<0.000000e+00> : vector<8x96xf32>
    %28 = tpu.matmul %26, %27, %cst_13 {dimension_numbers = #tpu.dot_dimension_numbers<[1], [0], [0], [1], [0, 0, 1, 1], [], []>} : vector<8x32xbf16>, vector<32x96xbf16>, vector<8x96xf32> -> vector<8x96xf32>
    %c0_14 = arith.constant 0 : index
    %c0_15 = arith.constant 0 : index
    %29 = vector.load %arg6[%c0_14, %c0_15] : memref<1x96xf32, #tpu.memory_space<vmem>>, vector<1x96xf32>
    %30 = vector.broadcast %29 : vector<1x96xf32> to vector<8x96xf32>
    %31 = arith.addf %28, %30 : vector<8x96xf32>
    %32 = arith.truncf %31 : vector<8x96xf32> to vector<8x96xbf16>
    %c0_16 = arith.constant 0 : index
    %c0_17 = arith.constant 0 : index
    %c0_18 = arith.constant 0 : index
    %c0_19 = arith.constant 0 : index
    %33 = vector.load %arg2[%c0_16, %c0_17, %c0_18, %c0_19] : memref<1x2x1x8xf32, #tpu.memory_space<vmem>>, vector<1x2x1x8xf32>
    %34 = vector.shape_cast %33 : vector<1x2x1x8xf32> to vector<2x1x8xf32>
    %35 = vector.extract_strided_slice %32 {offsets = [0, 0], sizes = [8, 16], strides = [1, 1]} : vector<8x96xbf16> to vector<8x16xbf16>
    %36 = vector.extract_strided_slice %32 {offsets = [0, 32], sizes = [8, 16], strides = [1, 1]} : vector<8x96xbf16> to vector<8x16xbf16>
    %37 = vector.extract_strided_slice %32 {offsets = [0, 64], sizes = [8, 16], strides = [1, 1]} : vector<8x96xbf16> to vector<8x16xbf16>
    %cst_20 = arith.constant dense<0.000000e+00> : vector<8x8xf32>
    %38 = tpu.matmul %35, %36, %cst_20 {dimension_numbers = #tpu.dot_dimension_numbers<[1], [1], [0], [0], [0, 0, 1, 0], [], []>} : vector<8x16xbf16>, vector<8x16xbf16>, vector<8x8xf32> -> vector<8x8xf32>
    %cst_21 = arith.constant 2.500000e-01 : f32
    %39 = vector.broadcast %cst_21 : f32 to vector<8x8xf32>
    %40 = arith.mulf %38, %39 : vector<8x8xf32>
    %41 = vector.extract_strided_slice %34 {offsets = [0, 0, 0], sizes = [1, 1, 8], strides = [1, 1, 1]} : vector<2x1x8xf32> to vector<1x1x8xf32>
    %42 = vector.shape_cast %41 : vector<1x1x8xf32> to vector<1x8xf32>
    %43 = vector.broadcast %42 : vector<1x8xf32> to vector<8x8xf32>
    %44 = arith.addf %40, %43 : vector<8x8xf32>
    %cst_22 = arith.constant dense<0xFF800000> : vector<8xf32>
    %45 = vector.multi_reduction <maximumf>, %44, %cst_22 [1] : vector<8x8xf32> to vector<8xf32>
    %46 = vector.shape_cast %45 : vector<8xf32> to vector<8x1xf32>
    %47 = vector.broadcast %46 : vector<8x1xf32> to vector<8x8xf32>
    %48 = arith.subf %44, %47 : vector<8x8xf32>
    %49 = math.exp %48 : vector<8x8xf32>
    %cst_23 = arith.constant dense<0.000000e+00> : vector<8xf32>
    %50 = vector.multi_reduction <add>, %49, %cst_23 [1] : vector<8x8xf32> to vector<8xf32>
    %51 = vector.shape_cast %50 : vector<8xf32> to vector<8x1xf32>
    %52 = tpu.reciprocal %51 {approx = true} : vector<8x1xf32> -> vector<8x1xf32>
    %53 = arith.mulf %51, %52 : vector<8x1xf32>
    %cst_24 = arith.constant 2.000000e+00 : f32
    %54 = vector.broadcast %cst_24 : f32 to vector<8x1xf32>
    %55 = arith.subf %54, %53 : vector<8x1xf32>
    %56 = arith.mulf %52, %55 : vector<8x1xf32>
    %57 = vector.broadcast %56 : vector<8x1xf32> to vector<8x8xf32>
    %58 = arith.mulf %49, %57 : vector<8x8xf32>
    %59 = arith.truncf %58 : vector<8x8xf32> to vector<8x8xbf16>
    %cst_25 = arith.constant dense<0.000000e+00> : vector<8x16xf32>
    %60 = tpu.matmul %59, %37, %cst_25 {dimension_numbers = #tpu.dot_dimension_numbers<[1], [0], [0], [1], [0, 0, 1, 1], [], []>} : vector<8x8xbf16>, vector<8x16xbf16>, vector<8x16xf32> -> vector<8x16xf32>
    %c0_26 = arith.constant 0 : index
    %c0_27 = arith.constant 0 : index
    %61 = vector.load %arg10[%c0_26, %c0_27] : memref<8x32xf32, #tpu.memory_space<vmem>>, vector<8x16xf32>
    tpu.vector_store %arg10[%c0_26, %c0_27], %60 {strides = array<i32>} : memref<8x32xf32, #tpu.memory_space<vmem>>, vector<8x16xf32>,
    %62 = vector.extract_strided_slice %32 {offsets = [0, 16], sizes = [8, 16], strides = [1, 1]} : vector<8x96xbf16> to vector<8x16xbf16>
    %63 = vector.extract_strided_slice %32 {offsets = [0, 48], sizes = [8, 16], strides = [1, 1]} : vector<8x96xbf16> to vector<8x16xbf16>
    %64 = vector.extract_strided_slice %32 {offsets = [0, 80], sizes = [8, 16], strides = [1, 1]} : vector<8x96xbf16> to vector<8x16xbf16>
    %cst_28 = arith.constant dense<0.000000e+00> : vector<8x8xf32>
    %65 = tpu.matmul %62, %63, %cst_28 {dimension_numbers = #tpu.dot_dimension_numbers<[1], [1], [0], [0], [0, 0, 1, 0], [], []>} : vector<8x16xbf16>, vector<8x16xbf16>, vector<8x8xf32> -> vector<8x8xf32>
    %cst_29 = arith.constant 2.500000e-01 : f32
    %66 = vector.broadcast %cst_29 : f32 to vector<8x8xf32>
    %67 = arith.mulf %65, %66 : vector<8x8xf32>
    %68 = vector.extract_strided_slice %34 {offsets = [1, 0, 0], sizes = [1, 1, 8], strides = [1, 1, 1]} : vector<2x1x8xf32> to vector<1x1x8xf32>
    %69 = vector.shape_cast %68 : vector<1x1x8xf32> to vector<1x8xf32>
    %70 = vector.broadcast %69 : vector<1x8xf32> to vector<8x8xf32>
    %71 = arith.addf %67, %70 : vector<8x8xf32>
    %cst_30 = arith.constant dense<0xFF800000> : vector<8xf32>
    %72 = vector.multi_reduction <maximumf>, %71, %cst_30 [1] : vector<8x8xf32> to vector<8xf32>
    %73 = vector.shape_cast %72 : vector<8xf32> to vector<8x1xf32>
    %74 = vector.broadcast %73 : vector<8x1xf32> to vector<8x8xf32>
    %75 = arith.subf %71, %74 : vector<8x8xf32>
    %76 = math.exp %75 : vector<8x8xf32>
    %cst_31 = arith.constant dense<0.000000e+00> : vector<8xf32>
    %77 = vector.multi_reduction <add>, %76, %cst_31 [1] : vector<8x8xf32> to vector<8xf32>
    %78 = vector.shape_cast %77 : vector<8xf32> to vector<8x1xf32>
    %79 = tpu.reciprocal %78 {approx = true} : vector<8x1xf32> -> vector<8x1xf32>
    %80 = arith.mulf %78, %79 : vector<8x1xf32>
    %cst_32 = arith.constant 2.000000e+00 : f32
    %81 = vector.broadcast %cst_32 : f32 to vector<8x1xf32>
    %82 = arith.subf %81, %80 : vector<8x1xf32>
    %83 = arith.mulf %79, %82 : vector<8x1xf32>
    %84 = vector.broadcast %83 : vector<8x1xf32> to vector<8x8xf32>
    %85 = arith.mulf %76, %84 : vector<8x8xf32>
    %86 = arith.truncf %85 : vector<8x8xf32> to vector<8x8xbf16>
    %cst_33 = arith.constant dense<0.000000e+00> : vector<8x16xf32>
    %87 = tpu.matmul %86, %64, %cst_33 {dimension_numbers = #tpu.dot_dimension_numbers<[1], [0], [0], [1], [0, 0, 1, 1], [], []>} : vector<8x8xbf16>, vector<8x16xbf16>, vector<8x16xf32> -> vector<8x16xf32>
    %c0_34 = arith.constant 0 : index
    %c16 = arith.constant 16 : index
    %88 = vector.load %arg10[%c0_34, %c16] : memref<8x32xf32, #tpu.memory_space<vmem>>, vector<8x16xf32>
    tpu.vector_store %arg10[%c0_34, %c16], %87 {strides = array<i32>} : memref<8x32xf32, #tpu.memory_space<vmem>>, vector<8x16xf32>,
    %c0_35 = arith.constant 0 : index
    %c0_36 = arith.constant 0 : index
    %89 = vector.load %arg10[%c0_35, %c0_36] : memref<8x32xf32, #tpu.memory_space<vmem>>, vector<8x32xf32>
    %90 = arith.truncf %89 : vector<8x32xf32> to vector<8x32xbf16>
    %c0_37 = arith.constant 0 : index
    %c0_38 = arith.constant 0 : index
    %91 = vector.load %arg7[%c0_37, %c0_38] : memref<32x32xbf16, #tpu.memory_space<vmem>>, vector<32x32xbf16>
    %cst_39 = arith.constant dense<0.000000e+00> : vector<8x32xf32>
    %92 = tpu.matmul %90, %91, %cst_39 {dimension_numbers = #tpu.dot_dimension_numbers<[1], [0], [0], [1], [0, 0, 1, 1], [], []>} : vector<8x32xbf16>, vector<32x32xbf16>, vector<8x32xf32> -> vector<8x32xf32>
    %c0_40 = arith.constant 0 : index
    %c0_41 = arith.constant 0 : index
    %93 = vector.load %arg8[%c0_40, %c0_41] : memref<1x32xf32, #tpu.memory_space<vmem>>, vector<1x32xf32>
    %94 = vector.broadcast %93 : vector<1x32xf32> to vector<8x32xf32>
    %95 = arith.addf %92, %94 : vector<8x32xf32>
    %96 = arith.addf %1, %95 : vector<8x32xf32>
    %c0_42 = arith.constant 0 : index
    %c0_43 = arith.constant 0 : index
    %c0_44 = arith.constant 0 : index
    %97 = vector.load %arg9[%c0_42, %c0_43, %c0_44] : memref<1x8x32xf32, #tpu.memory_space<vmem>>, vector<1x8x32xf32>
    %98 = vector.shape_cast %97 : vector<1x8x32xf32> to vector<8x32xf32>
    %99 = vector.shape_cast %96 : vector<8x32xf32> to vector<1x8x32xf32>
    tpu.vector_store %arg9[%c0_42, %c0_43, %c0_44], %99 {strides = array<i32>} : memref<1x8x32xf32, #tpu.memory_space<vmem>>, vector<1x8x32xf32>,
    return
  }
  func.func @transform_0(%arg0: i32) -> (i32, i32, i32) {
    %c0_i32 = arith.constant 0 : i32
    %c0_i32_0 = arith.constant 0 : i32
    %c0_i32_1 = arith.constant 0 : i32
    return %arg0, %c0_i32, %c0_i32_0 : i32, i32, i32
  }
  func.func @transform_1(%arg0: i32) -> (i32, i32, i32, i32) {
    %c0_i32 = arith.constant 0 : i32
    %c0_i32_0 = arith.constant 0 : i32
    %c0_i32_1 = arith.constant 0 : i32
    %c0_i32_2 = arith.constant 0 : i32
    return %arg0, %c0_i32, %c0_i32_0, %c0_i32_1 : i32, i32, i32, i32
  }
  func.func @transform_2(%arg0: i32) -> (i32, i32) {
    %c0_i32 = arith.constant 0 : i32
    %c0_i32_0 = arith.constant 0 : i32
    %c0_i32_1 = arith.constant 0 : i32
    return %c0_i32, %c0_i32_0 : i32, i32
  }
  func.func @transform_3(%arg0: i32) -> (i32, i32) {
    %c0_i32 = arith.constant 0 : i32
    %c0_i32_0 = arith.constant 0 : i32
    %c0_i32_1 = arith.constant 0 : i32
    return %c0_i32, %c0_i32_0 : i32, i32
  }
  func.func @transform_4(%arg0: i32) -> (i32, i32) {
    %c0_i32 = arith.constant 0 : i32
    %c0_i32_0 = arith.constant 0 : i32
    %c0_i32_1 = arith.constant 0 : i32
    return %c0_i32, %c0_i32_0 : i32, i32
  }
  func.func @transform_5(%arg0: i32) -> (i32, i32) {
    %c0_i32 = arith.constant 0 : i32
    %c0_i32_0 = arith.constant 0 : i32
    %c0_i32_1 = arith.constant 0 : i32
    return %c0_i32, %c0_i32_0 : i32, i32
  }
  func.func @transform_6(%arg0: i32) -> (i32, i32) {
    %c0_i32 = arith.constant 0 : i32
    %c0_i32_0 = arith.constant 0 : i32
    %c0_i32_1 = arith.constant 0 : i32
    return %c0_i32, %c0_i32_0 : i32, i32
  }
  func.func @transform_7(%arg0: i32) -> (i32, i32) {
    %c0_i32 = arith.constant 0 : i32
    %c0_i32_0 = arith.constant 0 : i32
    %c0_i32_1 = arith.constant 0 : i32
    return %c0_i32, %c0_i32_0 : i32, i32
  }
  func.func @transform_8(%arg0: i32) -> (i32, i32, i32) {
    %c0_i32 = arith.constant 0 : i32
    %c0_i32_0 = arith.constant 0 : i32
    %c0_i32_1 = arith.constant 0 : i32
    return %arg0, %c0_i32, %c0_i32_0 : i32, i32, i32
  }
}

</mosaic_0001>

<llo_original>
// kernel: tpu_custom_call.1
$region0: #{tpu_custom_call.1}
  #allocation0 [shape = 'u32[]', space=smem, size = 0x4, offset = 0x4, fixed_abs, tag = 'smem constant byte address 0x4 - core index']
  #allocation1 [shape = 'u32[72,128]{1,0:T(1,128)}', space=vmem, size = 0x9000, scoped, tag = 'internal scratch']
  #allocation2 [shape = 'f32[8,32]{1,0:T(8,128)}', space=vmem, size = 0x1000, scoped, tag = 'scratch operand']
  %s0 = inlined_call_operand.hbm [shape: f32[2,8,32], index: 0, kind: input, shape index: {}]
  %s1 = inlined_call_operand.hbm [shape: f32[2,2,1,8], index: 1, kind: input, shape index: {}]
  %s2 = inlined_call_operand.vmem [shape: f32[1,32], index: 2, kind: input, shape index: {}]
  %s3 = inlined_call_operand.vmem [shape: f32[1,32], index: 3, kind: input, shape index: {}]
  %s4 = inlined_call_operand.hbm [shape: bf16[32,96], index: 4, kind: input, shape index: {}]
  %s5 = inlined_call_operand.vmem [shape: f32[1,96], index: 5, kind: input, shape index: {}]
  %s6 = inlined_call_operand.hbm [shape: bf16[32,32], index: 6, kind: input, shape index: {}]
  %s7 = inlined_call_operand.vmem [shape: f32[1,32], index: 7, kind: input, shape index: {}]
  %s8 = inlined_call_operand.hbm [shape: f32[2,8,32], index: 8, kind: output, shape index: {}]
  %s9 = sld [smem:[#allocation0]]
  $region81: #{tpu_custom_call.1} parent=0
    _
  %s11 = ssub.s32 1, %s9
  %s12 = scalar_select 0, %s11, %s9
  $region1: #{tpu_custom_call.1} parent=0
    #allocation3 [shape = 'u8[8192]{0}', space=vmem, size = 0x2000, scoped, tag = 'input window, operand 0']
    #allocation4 [shape = 's32[2]{0}', space=sflag, size = 0x8, scoped, tag = 'scoped memory for tpu_custom_call.1']
    #allocation5 [shape = 's32[2]{0}', space=sflag, size = 0x8, scoped, tag = 'scoped memory for tpu_custom_call.1']
    #allocation6 [shape = 'u8[2048]{0}', space=vmem, size = 0x800, scoped, tag = 'input window, operand 1']
    #allocation7 [shape = 's32[2]{0}', space=sflag, size = 0x8, scoped, tag = 'scoped memory for tpu_custom_call.1']
    #allocation8 [shape = 'u8[8192]{0}', space=vmem, size = 0x2000, scoped, tag = 'input window, operand 4, single buffered']
    #allocation9 [shape = 'u8[8192]{0}', space=vmem, size = 0x2000, scoped, tag = 'input window, operand 6, single buffered']
    #allocation10 [shape = 's32[1]{0}', space=sflag, size = 0x4, scoped, tag = 'scoped memory for tpu_custom_call.1']
    #allocation11 [shape = 'u8[8192]{0}', space=vmem, size = 0x2000, scoped, tag = 'output window, operand 0']
    %13 = vsyncpa [#allocation4], 0
    %s14 = scalar_lea.sflag [#allocation4], 1
    %15 = vsyncpa %s14, 0
    %16 = vsyncpa [#allocation7], 0
    %s17 = scalar_lea.sflag [#allocation7], 1
    %18 = vsyncpa %s17, 0
    %19 = vsyncpa [#allocation10], 0
    %20 = vsyncpa [#allocation5], 0
    %s21 = scalar_lea.sflag [#allocation5], 1
    %22 = vsyncpa %s21, 0
    loop: start=0, step=1, limit=4
    $region2: #{tpu_custom_call.1} parent=1 // loop_pre_header
      _
    $region3: #{tpu_custom_call.1} parent=1 // loop_header
      %s24 = sphi 0, %s28
      %p25 = scmp.ge.s32.totalorder %s24, 4
      %s34 = sphi 0, %s36
      %s37 = sphi 0, %s34
      %s38 = sphi 0, %s37
      %s54 = sphi 0, %s38
      %s60 = sphi 0, %s62
      %s63 = sphi 0, %s60
      %s64 = sphi 0, %s63
      %s80 = sphi 0, %s64
      %s84 = sphi 0, %s84
      %s86 = sphi 0, %s84
      %s87 = sphi 0, %s86
      %s101 = sphi 0, %s87
      %s105 = sphi 0, %s105
      %s107 = sphi 0, %s105
      %s108 = sphi 0, %s107
      %s122 = sphi 0, %s108
      %s126 = sphi 0, %s126
      %s128 = sphi 0, %s126
      %s129 = sphi 0, %s128
      %s143 = sphi 0, %s129
      %s147 = sphi 0, %s147
      %s149 = sphi 0, %s147
      %s150 = sphi 0, %s149
      %s164 = sphi 0, %s150
      %s168 = sphi 0, %s168
      %s170 = sphi 0, %s168
      %s171 = sphi 0, %s170
      %s185 = sphi 0, %s171
      %s189 = sphi 0, %s189
      %s191 = sphi 0, %s189
      %s192 = sphi 0, %s191
      %s206 = sphi 0, %s192
      %s212 = sphi 0, %s214
      %s215 = sphi 0, %s212
      %s216 = sphi 0, %s215
      %s232 = sphi 0, %s216
    $region4: #{tpu_custom_call.1} parent=1 // loop_header_branch
      %27 = sbr.rel (%p25) target = $region8
    $region5: #{tpu_custom_call.1} parent=1 // loop_body
      %s29 = ssub.s32 %s24, 1
      %s30 = ssub.s32 %s24, 2
      %s31 = sadd.s32 %s24, 1
      %s32 = ssub.s32 %s24, %s31
      %p33 = scmp.eq.s32.totalorder %s32, 0
      %s35 = sadd.s32 %s34, 1
      %s36 = scalar_select %p33, %s34, %s35
      %p39 = pneg %p33
      %p40 = scmp.eq.s32.totalorder %s24, 1
      %p41 = por %p39, %p40
      %p42 = scmp.ne.s32.totalorder %s34, %s37
      %p43 = scmp.eq.s32.totalorder %s24, 0
      %p44 = por %p42, %p43
      %p45 = scmp.ne.s32.totalorder %s34, %s37
      %p46 = scmp.eq.s32.totalorder %s29, 1
      %p47 = por %p45, %p46
      %p48 = scmp.ne.s32.totalorder %s37, %s38
      %p49 = scmp.eq.s32.totalorder %s29, 0
      %p50 = por %p48, %p49
      %p51 = scmp.ne.s32.totalorder %s37, %s38
      %p52 = scmp.eq.s32.totalorder %s30, 1
      %p53 = por %p51, %p52
      %p55 = scmp.ne.s32.totalorder %s38, %s54
      %p56 = scmp.eq.s32.totalorder %s30, 0
      %p57 = por %p55, %p56
      %s58 = ssub.s32 %s24, %s31
      %p59 = scmp.eq.s32.totalorder %s58, 0
      %s61 = sadd.s32 %s60, 1
      %s62 = scalar_select %p59, %s60, %s61
      %p65 = pneg %p59
      %p66 = scmp.eq.s32.totalorder %s24, 1
      %p67 = por %p65, %p66
      %p68 = scmp.ne.s32.totalorder %s60, %s63
      %p69 = scmp.eq.s32.totalorder %s24, 0
      %p70 = por %p68, %p69
      %p71 = scmp.ne.s32.totalorder %s60, %s63
      %p72 = scmp.eq.s32.totalorder %s29, 1
      %p73 = por %p71, %p72
      %p74 = scmp.ne.s32.totalorder %s63, %s64
      %p75 = scmp.eq.s32.totalorder %s29, 0
      %p76 = por %p74, %p75
      %p77 = scmp.ne.s32.totalorder %s63, %s64
      %p78 = scmp.eq.s32.totalorder %s30, 1
      %p79 = por %p77, %p78
      %p81 = scmp.ne.s32.totalorder %s64, %s80
      %p82 = scmp.eq.s32.totalorder %s30, 0
      %p83 = por %p81, %p82
      %s85 = sadd.s32 %s84, 1
      %p88 = scmp.eq.s32.totalorder %s24, 1
      %p89 = scmp.ne.s32.totalorder %s84, %s86
      %p90 = scmp.eq.s32.totalorder %s24, 0
      %p91 = por %p89, %p90
      %p92 = scmp.ne.s32.totalorder %s84, %s86
      %p93 = scmp.eq.s32.totalorder %s29, 1
      %p94 = por %p92, %p93
      %p95 = scmp.ne.s32.totalorder %s86, %s87
      %p96 = scmp.eq.s32.totalorder %s29, 0
      %p97 = por %p95, %p96
      %p98 = scmp.ne.s32.totalorder %s86, %s87
      %p99 = scmp.eq.s32.totalorder %s30, 1
      %p100 = por %p98, %p99
      %p102 = scmp.ne.s32.totalorder %s87, %s101
      %p103 = scmp.eq.s32.totalorder %s30, 0
      %p104 = por %p102, %p103
      %s106 = sadd.s32 %s105, 1
      %p109 = scmp.eq.s32.totalorder %s24, 1
      %p110 = scmp.ne.s32.totalorder %s105, %s107
      %p111 = scmp.eq.s32.totalorder %s24, 0
      %p112 = por %p110, %p111
      %p113 = scmp.ne.s32.totalorder %s105, %s107
      %p114 = scmp.eq.s32.totalorder %s29, 1
      %p115 = por %p113, %p114
      %p116 = scmp.ne.s32.totalorder %s107, %s108
      %p117 = scmp.eq.s32.totalorder %s29, 0
      %p118 = por %p116, %p117
      %p119 = scmp.ne.s32.totalorder %s107, %s108
      %p120 = scmp.eq.s32.totalorder %s30, 1
      %p121 = por %p119, %p120
      %p123 = scmp.ne.s32.totalorder %s108, %s122
      %p124 = scmp.eq.s32.totalorder %s30, 0
      %p125 = por %p123, %p124
      %s127 = sadd.s32 %s126, 1
      %p130 = scmp.eq.s32.totalorder %s24, 1
      %p131 = scmp.ne.s32.totalorder %s126, %s128
      %p132 = scmp.eq.s32.totalorder %s24, 0
      %p133 = por %p131, %p132
      %p134 = scmp.ne.s32.totalorder %s126, %s128
      %p135 = scmp.eq.s32.totalorder %s29, 1
      %p136 = por %p134, %p135
      %p137 = scmp.ne.s32.totalorder %s128, %s129
      %p138 = scmp.eq.s32.totalorder %s29, 0
      %p139 = por %p137, %p138
      %p140 = scmp.ne.s32.totalorder %s128, %s129
      %p141 = scmp.eq.s32.totalorder %s30, 1
      %p142 = por %p140, %p141
      %p144 = scmp.ne.s32.totalorder %s129, %s143
      %p145 = scmp.eq.s32.totalorder %s30, 0
      %p146 = por %p144, %p145
      %s148 = sadd.s32 %s147, 1
      %p151 = scmp.eq.s32.totalorder %s24, 1
      %p152 = scmp.ne.s32.totalorder %s147, %s149
      %p153 = scmp.eq.s32.totalorder %s24, 0
      %p154 = por %p152, %p153
      %p155 = scmp.ne.s32.totalorder %s147, %s149
      %p156 = scmp.eq.s32.totalorder %s29, 1
      %p157 = por %p155, %p156
      %p158 = scmp.ne.s32.totalorder %s149, %s150
      %p159 = scmp.eq.s32.totalorder %s29, 0
      %p160 = por %p158, %p159
      %p161 = scmp.ne.s32.totalorder %s149, %s150
      %p162 = scmp.eq.s32.totalorder %s30, 1
      %p163 = por %p161, %p162
      %p165 = scmp.ne.s32.totalorder %s150, %s164
      %p166 = scmp.eq.s32.totalorder %s30, 0
      %p167 = por %p165, %p166
      %s169 = sadd.s32 %s168, 1
      %p172 = scmp.eq.s32.totalorder %s24, 1
      %p173 = scmp.ne.s32.totalorder %s168, %s170
      %p174 = scmp.eq.s32.totalorder %s24, 0
      %p175 = por %p173, %p174
      %p176 = scmp.ne.s32.totalorder %s168, %s170
      %p177 = scmp.eq.s32.totalorder %s29, 1
      %p178 = por %p176, %p177
      %p179 = scmp.ne.s32.totalorder %s170, %s171
      %p180 = scmp.eq.s32.totalorder %s29, 0
      %p181 = por %p179, %p180
      %p182 = scmp.ne.s32.totalorder %s170, %s171
      %p183 = scmp.eq.s32.totalorder %s30, 1
      %p184 = por %p182, %p183
      %p186 = scmp.ne.s32.totalorder %s171, %s185
      %p187 = scmp.eq.s32.totalorder %s30, 0
      %p188 = por %p186, %p187
      %s190 = sadd.s32 %s189, 1
      %p193 = scmp.eq.s32.totalorder %s24, 1
      %p194 = scmp.ne.s32.totalorder %s189, %s191
      %p195 = scmp.eq.s32.totalorder %s24, 0
      %p196 = por %p194, %p195
      %p197 = scmp.ne.s32.totalorder %s189, %s191
      %p198 = scmp.eq.s32.totalorder %s29, 1
      %p199 = por %p197, %p198
      %p200 = scmp.ne.s32.totalorder %s191, %s192
      %p201 = scmp.eq.s32.totalorder %s29, 0
      %p202 = por %p200, %p201
      %p203 = scmp.ne.s32.totalorder %s191, %s192
      %p204 = scmp.eq.s32.totalorder %s30, 1
      %p205 = por %p203, %p204
      %p207 = scmp.ne.s32.totalorder %s192, %s206
      %p208 = scmp.eq.s32.totalorder %s30, 0
      %p209 = por %p207, %p208
      %s210 = ssub.s32 %s24, %s31
      %p211 = scmp.eq.s32.totalorder %s210, 0
      %s213 = sadd.s32 %s212, 1
      %s214 = scalar_select %p211, %s212, %s213
      %p217 = pneg %p211
      %p218 = scmp.eq.s32.totalorder %s24, 1
      %p219 = por %p217, %p218
      %p220 = scmp.ne.s32.totalorder %s212, %s215
      %p221 = scmp.eq.s32.totalorder %s24, 0
      %p222 = por %p220, %p221
      %p223 = scmp.ne.s32.totalorder %s212, %s215
      %p224 = scmp.eq.s32.totalorder %s29, 1
      %p225 = por %p223, %p224
      %p226 = scmp.ne.s32.totalorder %s215, %s216
      %p227 = scmp.eq.s32.totalorder %s29, 0
      %p228 = por %p226, %p227
      %p229 = scmp.ne.s32.totalorder %s215, %s216
      %p230 = scmp.eq.s32.totalorder %s30, 1
      %p231 = por %p229, %p230
      %p233 = scmp.ne.s32.totalorder %s216, %s232
      %p234 = scmp.eq.s32.totalorder %s30, 0
      %p235 = por %p233, %p234
      %p236 = scmp.le.s32.totalorder 1, %s24
      %p237 = scmp.lt.s32.totalorder %s24, 3
      %p238 = pnand %p236, %p237
      %p239 = pneg %p238
      // Predicated region
      $region9: #{tpu_custom_call.1} parent=5 // pred_check
        _
      $region10: #{tpu_custom_call.1} parent=5 // pred_check_branch
        %241 = sbr.rel (%p238) target = $region12
      $region11: #{tpu_custom_call.1} parent=5 // pred_region
        %s242 = ssub.s32 %s24, 1
        // Predicated region
        $region13: #{tpu_custom_call.1} parent=11 // pred_check
          %p243 = pneg %p97
        $region14: #{tpu_custom_call.1} parent=11 // pred_check_branch
          %245 = sbr.rel (%p243) target = $region16
        $region15: #{tpu_custom_call.1} parent=11 // pred_region
          _
        $region16: #{tpu_custom_call.1} parent=11 // pred_fallthru
          _
        // Predicated region
        $region17: #{tpu_custom_call.1} parent=11 // pred_check
          %p246 = pneg %p118
        $region18: #{tpu_custom_call.1} parent=11 // pred_check_branch
          %248 = sbr.rel (%p246) target = $region20
        $region19: #{tpu_custom_call.1} parent=11 // pred_region
          _
        $region20: #{tpu_custom_call.1} parent=11 // pred_fallthru
          _
        // Predicated region
        $region21: #{tpu_custom_call.1} parent=11 // pred_check
          %p249 = pneg %p139
        $region22: #{tpu_custom_call.1} parent=11 // pred_check_branch
          %251 = sbr.rel (%p249) target = $region24
        $region23: #{tpu_custom_call.1} parent=11 // pred_region
          %253 = vsyncadd [#allocation7], 0
          %s254 = sshll.u32 %s4, 4
          %s255 = int_to_ptr.hbm [resolvable:$true] %s254
          %s256 = sshll.u32 [#allocation8], 4
          %s257 = int_to_ptr.vmem [resolvable:$true] %s256
          %262 = dma.hbm_to_vmem [thread:$0]  %s255, 256, %s257, [#allocation7], 64, 64, 4
        $region24: #{tpu_custom_call.1} parent=11 // pred_fallthru
          _
        // Predicated region
        $region25: #{tpu_custom_call.1} parent=11 // pred_check
          %p263 = pneg %p160
        $region26: #{tpu_custom_call.1} parent=11 // pred_check_branch
          %265 = sbr.rel (%p263) target = $region28
        $region27: #{tpu_custom_call.1} parent=11 // pred_region
          _
        $region28: #{tpu_custom_call.1} parent=11 // pred_fallthru
          _
        // Predicated region
        $region29: #{tpu_custom_call.1} parent=11 // pred_check
          %p266 = pneg %p181
        $region30: #{tpu_custom_call.1} parent=11 // pred_check_branch
          %268 = sbr.rel (%p266) target = $region32
        $region31: #{tpu_custom_call.1} parent=11 // pred_region
          %270 = vsyncadd [#allocation10], 0
          %s271 = sshll.u32 %s6, 4
          %s272 = int_to_ptr.hbm [resolvable:$true] %s271
          %s273 = sshll.u32 [#allocation9], 4
          %s274 = int_to_ptr.vmem [resolvable:$true] %s273
          %279 = dma.hbm_to_vmem [thread:$0]  %s272, 256, %s274, [#allocation10], 64, 64, 4
        $region32: #{tpu_custom_call.1} parent=11 // pred_fallthru
          _
        // Predicated region
        $region33: #{tpu_custom_call.1} parent=11 // pred_check
          %p280 = pneg %p202
        $region34: #{tpu_custom_call.1} parent=11 // pred_check_branch
          %282 = sbr.rel (%p280) target = $region36
        $region35: #{tpu_custom_call.1} parent=11 // pred_region
          _
        $region36: #{tpu_custom_call.1} parent=11 // pred_fallthru
          _
      $region12: #{tpu_custom_call.1} parent=5 // pred_fallthru
        _
      %p283 = scmp.lt.s32.totalorder %s24, 2
      // Predicated region
      $region37: #{tpu_custom_call.1} parent=5 // pred_check
        %p284 = pneg %p283
      $region38: #{tpu_custom_call.1} parent=5 // pred_check_branch
        %286 = sbr.rel (%p284) target = $region40
      $region39: #{tpu_custom_call.1} parent=5 // pred_region
        // Predicated region
        $region41: #{tpu_custom_call.1} parent=39 // pred_check
          %p287 = pneg %p44
        $region42: #{tpu_custom_call.1} parent=39 // pred_check_branch
          %289 = sbr.rel (%p287) target = $region44
        $region43: #{tpu_custom_call.1} parent=39 // pred_region
          %s290 = sand.u32 %s34, 1
          %s291 = scalar_lea.sflag [#allocation4], %s290
          %s292 = sand.u32 %s34, 1
          %s293 = smul.addr %s292, 8
          %s294 = scalar_lea.vmem [#allocation3], %s293
          %296 = vsyncadd %s291, 0
          %s297 = smul.addr %s24, 8
          %s298 = scalar_lea.hbm %s0, %s297
          %s300 = sshll.u32 %s298, 4
          %s301 = int_to_ptr.hbm [resolvable:$true] %s300
          %s302 = sshll.u32 %s294, 4
          %s303 = int_to_ptr.vmem [resolvable:$true] %s302
          %305 = dma.hbm_to_vmem [thread:$0]  %s301, 128, %s303, %s291
        $region44: #{tpu_custom_call.1} parent=39 // pred_fallthru
          _
        // Predicated region
        $region45: #{tpu_custom_call.1} parent=39 // pred_check
          %p306 = pneg %p70
        $region46: #{tpu_custom_call.1} parent=39 // pred_check_branch
          %308 = sbr.rel (%p306) target = $region48
        $region47: #{tpu_custom_call.1} parent=39 // pred_region
          %s309 = sand.u32 %s24, 1
          %s310 = scalar_lea.sflag [#allocation7], %s309
          %s311 = sand.u32 %s60, 1
          %s312 = smul.addr %s311, 2
          %s313 = scalar_lea.vmem [#allocation6], %s312
          %315 = vsyncadd %s310, 0
          %s316 = smul.addr %s24, 2
          %s317 = scalar_lea.hbm %s1, %s316
          %s318 = sshll.u32 %s317, 4
          %s319 = int_to_ptr.hbm [resolvable:$true] %s318
          %s320 = sshll.u32 %s313, 4
          %s321 = int_to_ptr.vmem [resolvable:$true] %s320
          %326 = dma.hbm_to_vmem [thread:$0]  %s319, 32, %s321, %s310, 16, 16, 1
        $region48: #{tpu_custom_call.1} parent=39 // pred_fallthru
          _
      $region40: #{tpu_custom_call.1} parent=5 // pred_fallthru
        _
      %p327 = scmp.le.s32.totalorder 1, %s24
      %p328 = scmp.lt.s32.totalorder %s24, 3
      %p329 = pnand %p327, %p328
      %p330 = pneg %p329
      // Predicated region
      $region49: #{tpu_custom_call.1} parent=5 // pred_check
        _
      $region50: #{tpu_custom_call.1} parent=5 // pred_check_branch
        %332 = sbr.rel (%p329) target = $region52
      $region51: #{tpu_custom_call.1} parent=5 // pred_region
        %s333 = ssub.s32 %s24, 1
        %s334 = sand.u32 %s37, 1
        %s335 = scalar_lea.sflag [#allocation4], %s334
        %s336 = sand.u32 %s37, 1
        %s337 = smul.addr %s336, 8
        %s338 = scalar_lea.vmem [#allocation3], %s337
        // Predicated region
        $region53: #{tpu_custom_call.1} parent=51 // pred_check
          %p339 = pneg %p50
        $region54: #{tpu_custom_call.1} parent=51 // pred_check_branch
          %341 = sbr.rel (%p339) target = $region56
        $region55: #{tpu_custom_call.1} parent=51 // pred_region
          %343 = dma.done %s335, 128
        $region56: #{tpu_custom_call.1} parent=51 // pred_fallthru
          _
        %s344 = sand.u32 %s29, 1
        %s345 = scalar_lea.sflag [#allocation7], %s344
        %s346 = sand.u32 %s63, 1
        %s347 = smul.addr %s346, 2
        %s348 = scalar_lea.vmem [#allocation6], %s347
        // Predicated region
        $region57: #{tpu_custom_call.1} parent=51 // pred_check
          %p349 = pneg %p76
        $region58: #{tpu_custom_call.1} parent=51 // pred_check_branch
          %351 = sbr.rel (%p349) target = $region60
        $region59: #{tpu_custom_call.1} parent=51 // pred_region
          %353 = dma.done %s345, 32
        $region60: #{tpu_custom_call.1} parent=51 // pred_fallthru
          _
        // Predicated region
        $region61: #{tpu_custom_call.1} parent=51 // pred_check
          %p354 = pneg %p139
        $region62: #{tpu_custom_call.1} parent=51 // pred_check_branch
          %356 = sbr.rel (%p354) target = $region64
        $region63: #{tpu_custom_call.1} parent=51 // pred_region
          %358 = dma.done [#allocation7], 256
        $region64: #{tpu_custom_call.1} parent=51 // pred_fallthru
          _
        // Predicated region
        $region65: #{tpu_custom_call.1} parent=51 // pred_check
          %p359 = pneg %p181
        $region66: #{tpu_custom_call.1} parent=51 // pred_check_branch
          %361 = sbr.rel (%p359) target = $region68
        $region67: #{tpu_custom_call.1} parent=51 // pred_region
          %363 = dma.done [#allocation10], 256
        $region68: #{tpu_custom_call.1} parent=51 // pred_fallthru
          _
        %s364 = sand.u32 %s37, 1
        %s365 = scalar_lea.sflag [#allocation4], %s364
        %s366 = sand.u32 %s37, 1
        %s367 = smul.addr %s366, 8
        %s368 = scalar_lea.vmem [#allocation3], %s367
        %p369 = pneg %p50
        %p370 = pneg %p47
        %s371 = sand.u32 %s29, 1
        %s372 = scalar_lea.sflag [#allocation7], %s371
        %s373 = sand.u32 %s63, 1
        %s374 = smul.addr %s373, 2
        %s375 = scalar_lea.vmem [#allocation6], %s374
        %p376 = pneg %p76
        %p377 = pneg %p73
        %p378 = pneg %p97
        %p379 = pneg %p94
        %p380 = pneg %p118
        %p381 = pneg %p115
        %p382 = pneg %p139
        %p383 = pneg %p136
        %p384 = pneg %p160
        %p385 = pneg %p157
        %p386 = pneg %p181
        %p387 = pneg %p178
        %p388 = pneg %p202
        %p389 = pneg %p199
        %p390 = pneg %p228
        %p391 = pneg %p225
        %s392 = sand.u32 %s215, 1
        %s393 = scalar_lea.sflag [#allocation5], %s392
        %s394 = sand.u32 %s215, 1
        %s395 = smul.addr %s394, 8
        %s396 = scalar_lea.vmem [#allocation11], %s395
        %v398 = vld [vmem:[%s338] sm:$0xff]
        %vm399 = vcmask 261120
        %v400 = vsel %vm399, %v398, 0.0
        %401 = vadd.xlane.f32.xlu0 %v400
        %v402 = vpop.xlane.xlu0 %401
        %v403 = vrcp.pop 32.0
        %v404 = vmul.f32 32.0, %v403
        %v405 = vsub.f32 1.0, %v404
        %v406 = vmul.f32 %v403, %v405
        %v407 = vadd.f32 %v403, %v406
        %vm408 = vweird.f32 %v403
        %v409 = vsel %vm408, %v403, %v407
        %v410 = vmul.f32 %v402, %v409
        %v411 = vsub.f32 %v398, %v410
        %v412 = vmul.f32 %v411, %v411
        %v413 = vsel %vm399, %v412, 0.0
        %414 = vadd.xlane.f32.xlu0 %v413
        %v415 = vpop.xlane.xlu0 %414
        %v416 = vmul.f32 %v415, 0.032258064
        %v417 = vrsqrt.pop %v416
        %v418 = vmul.f32 %v417, %v416
        %v419 = vmul.f32 %v418, %v417
        %v420 = vmul.f32 0.5, %v419
        %v421 = vsub.f32 1.5, %v420
        %v422 = vmul.f32 %v417, %v421
        %v423 = vmul.f32 %v416, %v422
        %vm424 = vcmp.eq.f32.partialorder %v416, inf
        %v425 = vsel %vm424, %v416, %v423
        %vm426 = vcmp.eq.f32.partialorder %v416, 0.0
        %v427 = vand.u32 %v416, 2147483648
        %v428 = vsel %vm426, %v427, %v425
        %v429 = vadd.f32 %v428, 1e-06
        %v430 = vrcp.pop %v429
        %v431 = vmul.f32 %v429, %v430
        %v432 = vsub.f32 1.0, %v431
        %v433 = vmul.f32 %v430, %v432
        %v434 = vadd.f32 %v430, %v433
        %vm435 = vweird.f32 %v429
        %vm436 = vweird.f32 %v430
        %vm437 = vmor %vm435, %vm436
        %v438 = vsel %vm437, %v430, %v434
        %v439 = vand.u32 2147483647, %v429
        %vm440 = vcmp.eq.f32.partialorder %v439, 8.507059e+37
        %v441 = vand.u32 %v429, 2147483648
        %v442 = vor.u32 1.1754944e-38, %v441
        %v443 = vsel %vm440, %v442, %v438
        %v444 = vmul.f32 1.0, %v443
        %v445 = vld [vmem:[%s2] sm:$0x1]
        %v447 = vperm.slane %v445, 0
        %v449 = vmul.f32 %v447, %v411
        %v450 = vmul.f32 %v449, %v444
        %v451 = vld [vmem:[%s3] sm:$0x1]
        %v453 = vperm.slane %v451, 0
        %v455 = vadd.f32 %v450, %v453
        %v456 = vpack.c.bf16 %v455, %v455
        %v457 = vld [vmem:[#allocation8] sm:$0xf]
        %v458 = vld [vmem:[#allocation8 + $0x4] sm:$0xf]
        %v459 = vld [vmem:[#allocation8 + $0x8] sm:$0xf]
        %v460 = vld [vmem:[#allocation8 + $0xc] sm:$0xf]
        %v461 = vld [vmem:[%s5] sm:$0x1]
        %v463 = vperm.slane %v461, 0
        %v469 = vunpack.c.l.b16 %v457
        %v470 = vunpack.c.l.b16 %v458
        %v471 = vunpack.c.l.b16 %v459
        %v472 = vunpack.c.l.b16 %v460
        %v473 = vpack.c.b16 %v470, %v469
        %v474 = vpack.c.b16 %v472, %v471
        %v478 = vsel %vm399, %v456, 0
        %480 = vmatpush.bf16.msra.mxu0 0
        %481 = vmatpush.bf16.msra.mxu0 0
        %482 = vmatpush.bf16.msra.mxu0 0
        %483 = vmatpush.bf16.msra.mxu0 0
        %484 = vmatpush.bf16.msra.mxu0 0
        %485 = vmatpush.bf16.msra.mxu0 0
        %486 = vmatpush.bf16.msra.mxu0 %v474
        %487 = vmatpush.bf16.msra.mxu0 %v473
        %488 = vmatmul.bf16.gmra.mxu0 %v478
        %v489 = vpop.f32.mrf.mxu0
        %v490 = vadd.f32 %v463, %v489
        %v491 = vpop.f32.mrf.mxu0
        %492 = vdwg.mxu0
        %v493 = vpack.c.bf16 %v490, %v490
        %v494 = vld [vmem:[%s348] sm:$0x1]
        %v495 = vld [vmem:[%s348 + $0x1] sm:$0x1]
        %v497 = vunpack.c.l.b16 %v493
        %v498 = vpack.c.b16 %v497, %v497
        %499 = vrot.lane.b32.xlu0 %v498, 96
        %v500 = vpop.permute.xlu0 %499
        %vm501 = vcmask 130048
        %v503 = vsel %vm501, %v493, 0
        %v506 = vsel %vm501, %v500, 0
        %508 = vmatpush.bf16.xpose.msra.mxu0 0
        %509 = vmatpush.bf16.xpose.msra.mxu0 0
        %510 = vmatpush.bf16.xpose.msra.mxu0 0
        %511 = vmatpush.bf16.xpose.msra.mxu0 0
        %512 = vmatpush.bf16.xpose.msra.mxu0 0
        %513 = vmatpush.bf16.xpose.msra.mxu0 0
        %514 = vmatpush.bf16.xpose.msra.mxu0 0
        %515 = vmatpush.bf16.xpose.msra.mxu0 %v506
        %516 = vmatmul.bf16.gmra.mxu0 %v503
        %v517 = vpop.f32.mrf.mxu0
        %v518 = vadd.f32 0.0, %v517
        %v519 = vpop.f32.mrf.mxu0
        %520 = vdwg.mxu0
        %v521 = vmul.f32 %v518, 0.25
        %v523 = vperm.slane %v494, 0
        %v525 = vadd.f32 %v521, %v523
        %vm526 = vcmask 64512
        %v527 = vsel %vm526, %v525, -inf
        %528 = vmax.xlane.f32.xlu0 %v527
        %v529 = vpop.xlane.xlu0 %528
        %v530 = vsub.f32 %v525, %v529
        %v531 = vmul.f32 %v530, 1.442695
        %v532 = vpow.pop %v531
        %v533 = vsel %vm526, %v532, 0.0
        %534 = vadd.xlane.f32.xlu0 %v533
        %v535 = vpop.xlane.xlu0 %534
        %v536 = vrcp.pop %v535
        %v537 = vmul.f32 %v535, %v536
        %v538 = vsub.f32 2.0, %v537
        %v539 = vmul.f32 %v536, %v538
        %v540 = vmul.f32 %v532, %v539
        %v541 = vpack.c.bf16 %v540, %v540
        %542 = vrot.lane.b32.xlu0 %v498, 64
        %v543 = vpop.permute.xlu0 %542
        %v545 = vsel %vm526, %v541, 0
        %vm547 = vcmask 1043456
        %v549 = vsel %vm547, %v543, 0
        %551 = vmatpush.bf16.msra.mxu0 0
        %552 = vmatpush.bf16.msra.mxu0 0
        %553 = vmatpush.bf16.msra.mxu0 0
        %554 = vmatpush.bf16.msra.mxu0 0
        %555 = vmatpush.bf16.msra.mxu0 0
        %556 = vmatpush.bf16.msra.mxu0 0
        %557 = vmatpush.bf16.msra.mxu0 0
        %558 = vmatpush.bf16.msra.mxu0 %v549
        %559 = vmatmul.bf16.gmra.mxu0 %v545
        %v560 = vpop.f32.mrf.mxu0
        %v561 = vadd.f32 0.0, %v560
        %v562 = vpop.f32.mrf.mxu0
        %563 = vdwg.mxu0
        %564 = vst.msk [vmem:[#allocation2] sm:$0xff] %vm501, %v561
        %565 = vrot.lane.b32.xlu0 %v498, 112
        %v566 = vpop.permute.xlu0 %565
        %567 = vrot.lane.b32.xlu0 %v498, 80
        %v568 = vpop.permute.xlu0 %567
        %v570 = vsel %vm501, %v566, 0
        %v573 = vsel %vm501, %v568, 0
        %575 = vmatpush.bf16.xpose.msra.mxu0 0
        %576 = vmatpush.bf16.xpose.msra.mxu0 0
        %577 = vmatpush.bf16.xpose.msra.mxu0 0
        %578 = vmatpush.bf16.xpose.msra.mxu0 0
        %579 = vmatpush.bf16.xpose.msra.mxu0 0
        %580 = vmatpush.bf16.xpose.msra.mxu0 0
        %581 = vmatpush.bf16.xpose.msra.mxu0 0
        %582 = vmatpush.bf16.xpose.msra.mxu0 %v573
        %583 = vmatmul.bf16.gmra.mxu0 %v570
        %v584 = vpop.f32.mrf.mxu0
        %v585 = vadd.f32 0.0, %v584
        %v586 = vpop.f32.mrf.mxu0
        %587 = vdwg.mxu0
        %v588 = vmul.f32 %v585, 0.25
        %v590 = vperm.slane %v495, 0
        %v592 = vadd.f32 %v588, %v590
        %v593 = vsel %vm526, %v592, -inf
        %594 = vmax.xlane.f32.xlu0 %v593
        %v595 = vpop.xlane.xlu0 %594
        %v596 = vsub.f32 %v592, %v595
        %v597 = vmul.f32 %v596, 1.442695
        %v598 = vpow.pop %v597
        %v599 = vsel %vm526, %v598, 0.0
        %600 = vadd.xlane.f32.xlu0 %v599
        %v601 = vpop.xlane.xlu0 %600
        %v602 = vrcp.pop %v601
        %v603 = vmul.f32 %v601, %v602
        %v604 = vsub.f32 2.0, %v603
        %v605 = vmul.f32 %v602, %v604
        %v606 = vmul.f32 %v598, %v605
        %v607 = vpack.c.bf16 %v606, %v606
        %608 = vrot.lane.b32.xlu0 %v498, 48
        %v609 = vpop.permute.xlu0 %608
        %v611 = vsel %vm526, %v607, 0
        %v614 = vsel %vm547, %v609, 0
        %616 = vmatpush.bf16.msra.mxu0 0
        %617 = vmatpush.bf16.msra.mxu0 0
        %618 = vmatpush.bf16.msra.mxu0 0
        %619 = vmatpush.bf16.msra.mxu0 0
        %620 = vmatpush.bf16.msra.mxu0 0
        %621 = vmatpush.bf16.msra.mxu0 0
        %622 = vmatpush.bf16.msra.mxu0 0
        %623 = vmatpush.bf16.msra.mxu0 %v614
        %624 = vmatmul.bf16.gmra.mxu0 %v611
        %v625 = vpop.f32.mrf.mxu0
        %v626 = vadd.f32 0.0, %v625
        %v627 = vpop.f32.mrf.mxu0
        %628 = vdwg.mxu0
        %630 = vrot.lane.b32.xlu0 %v626, 16
        %v631 = vpop.permute.xlu0 %630
        %vm633 = vcmask 261248
        %634 = vst.msk [vmem:[#allocation2] sm:$0xff] %vm633, %v631
        %v635 = vld [vmem:[#allocation2] sm:$0xff]
        %v636 = vpack.c.bf16 %v635, %v635
        %v637 = vld [vmem:[#allocation9] sm:$0xf]
        %v638 = vld [vmem:[#allocation9 + $0x4] sm:$0xf]
        %v639 = vld [vmem:[#allocation9 + $0x8] sm:$0xf]
        %v640 = vld [vmem:[#allocation9 + $0xc] sm:$0xf]
        %v641 = vld [vmem:[%s7] sm:$0x1]
        %v643 = vperm.slane %v641, 0
        %v649 = vunpack.c.l.b16 %v637
        %v650 = vunpack.c.l.b16 %v638
        %v651 = vunpack.c.l.b16 %v639
        %v652 = vunpack.c.l.b16 %v640
        %v653 = vpack.c.b16 %v650, %v649
        %v654 = vpack.c.b16 %v652, %v651
        %v658 = vsel %vm399, %v636, 0
        %660 = vmatpush.bf16.msra.mxu0 0
        %661 = vmatpush.bf16.msra.mxu0 0
        %662 = vmatpush.bf16.msra.mxu0 0
        %663 = vmatpush.bf16.msra.mxu0 0
        %664 = vmatpush.bf16.msra.mxu0 0
        %665 = vmatpush.bf16.msra.mxu0 0
        %666 = vmatpush.bf16.msra.mxu0 %v654
        %667 = vmatpush.bf16.msra.mxu0 %v653
        %668 = vmatmul.bf16.gmra.mxu0 %v658
        %v669 = vpop.f32.mrf.mxu0
        %v670 = vadd.f32 %v643, %v669
        %v671 = vpop.f32.mrf.mxu0
        %672 = vdwg.mxu0
        %v673 = vadd.f32 %v398, %v670
        %674 = vst.msk [vmem:[%s396] sm:$0xff] %vm399, %v673
        %s675 = sand.u32 %s215, 1
        %s676 = scalar_lea.sflag [#allocation5], %s675
        %s677 = sand.u32 %s215, 1
        %s678 = smul.addr %s677, 8
        %s679 = scalar_lea.vmem [#allocation11], %s678
        // Predicated region
        $region69: #{tpu_custom_call.1} parent=51 // pred_check
          %p680 = pneg %p225
        $region70: #{tpu_custom_call.1} parent=51 // pred_check_branch
          %682 = sbr.rel (%p680) target = $region72
        $region71: #{tpu_custom_call.1} parent=51 // pred_region
          %684 = vsyncadd %s676, 0
          %s685 = smul.addr %s29, 8
          %s686 = scalar_lea.hbm %s8, %s685
          %s688 = sshll.u32 %s679, 4
          %s689 = int_to_ptr.vmem [resolvable:$true] %s688
          %s690 = sshll.u32 %s686, 4
          %s691 = int_to_ptr.hbm [resolvable:$true] %s690
          %693 = dma.vmem_to_hbm [thread:$0]  %s689, 128, %s691, %s676
        $region72: #{tpu_custom_call.1} parent=51 // pred_fallthru
          _
      $region52: #{tpu_custom_call.1} parent=5 // pred_fallthru
        _
      %p694 = scmp.le.s32.totalorder 2, %s24
      // Predicated region
      $region73: #{tpu_custom_call.1} parent=5 // pred_check
        %p695 = pneg %p694
      $region74: #{tpu_custom_call.1} parent=5 // pred_check_branch
        %697 = sbr.rel (%p695) target = $region76
      $region75: #{tpu_custom_call.1} parent=5 // pred_region
        %s698 = ssub.s32 %s24, 2
        // Predicated region
        $region77: #{tpu_custom_call.1} parent=75 // pred_check
          %p699 = pneg %p231
        $region78: #{tpu_custom_call.1} parent=75 // pred_check_branch
          %701 = sbr.rel (%p699) target = $region80
        $region79: #{tpu_custom_call.1} parent=75 // pred_region
          %s702 = sand.u32 %s216, 1
          %s703 = scalar_lea.sflag [#allocation5], %s702
          %s704 = sand.u32 %s216, 1
          %s705 = smul.addr %s704, 8
          %s706 = scalar_lea.vmem [#allocation11], %s705
          %708 = dma.done %s703, 128
        $region80: #{tpu_custom_call.1} parent=75 // pred_fallthru
          _
      $region76: #{tpu_custom_call.1} parent=5 // pred_fallthru
        _
    $region6: #{tpu_custom_call.1} parent=1 // loop_footer
      %s28 = sadd.s32 1, %s24
    $region7: #{tpu_custom_call.1} parent=1 // loop_footer_branch
      %23 = sbr.rel target = $region3
    $region8: #{tpu_custom_call.1} parent=1 // loop_exit
      _
    %709 = vsyncpa [#allocation4], 1
    %s710 = scalar_lea.sflag [#allocation4], 1
    %711 = vsyncpa %s710, 1
    %712 = vsyncpa [#allocation7], 1
    %s713 = scalar_lea.sflag [#allocation7], 1
    %714 = vsyncpa %s713, 1
    %715 = vsyncpa [#allocation10], 1
    %716 = vsyncpa [#allocation5], 1
    %s717 = scalar_lea.sflag [#allocation5], 1
    %718 = vsyncpa %s717, 1

</llo_original>
